<compile_context>
chip_gen: v7x
topology: tpu7x:2x2x1
jax: 0.10.0
libtpu: 0.0.40
codegen_flags: <defaults>
</compile_context>

<pallas_src>
import functools

import jax
import jax.numpy as jnp
from jax import lax
from jax.experimental import pallas as pl
from jax.experimental.pallas import tpu as pltpu


# ---------------------------------------------------------------------------
# Hardware / budget helpers
# ---------------------------------------------------------------------------

def _vmem_capacity_bytes():
    """Physical VMEM per TensorCore; conservative 64 MiB (v7x) fallback."""
    try:
        info = pltpu.get_tpu_info()
        for attr in ("vmem_capacity_bytes", "vmem_size_bytes", "vmem_bytes"):
            v = getattr(info, attr, None)
            if v:
                return int(v)
    except Exception:
        pass
    return 64 << 20


def _compiler_params(block_bytes, cap, semantics):
    # Double-buffered footprint ~= 2 input + 2 output buffers of `block_bytes`
    # plus small params/scratch; keep headroom below physical VMEM capacity.
    footprint = 4 * int(block_bytes) + (2 << 20)
    limit = min(cap - (4 << 20), max(footprint + (8 << 20), 32 << 20))
    return pltpu.CompilerParams(
        dimension_semantics=semantics, vmem_limit_bytes=int(limit))


# ---------------------------------------------------------------------------
# Tile selection
# ---------------------------------------------------------------------------

def _lane_tile_candidates(H):
    if H % 128 == 0:
        return [d for d in range(128, H + 1, 128) if H % d == 0]
    return [H]  # full-extent last dim is always legal (masked stores if < 128)


def _choose_tiles_resident(B, S, H, itemsize, target_block_bytes):
    """Pick (TB, TH): grow lane-dense TH first, then pack batch rows."""
    target_elems = max(1, target_block_bytes // itemsize)
    cands = _lane_tile_candidates(H)
    th = cands[0]
    for cand in cands:                       # TH first: lane-dense stores, w/b reuse
        if S * cand <= target_elems:
            th = cand
    cap_tb = max(1, target_elems // (S * th))
    tb = 1
    for d in range(1, min(B, cap_tb) + 1):   # then amortize per-step overhead
        if B % d == 0:
            tb = d
    # v7x has 2 TensorCores: make sure the (parallel) grid exposes >= 2 blocks.
    if (B // tb) * (H // th) < 2:
        if B > 1:
            for d in range(B // 2, 0, -1):
                if B % d == 0:
                    tb = d
                    break
        elif len(cands) > 1:
            smaller = [c for c in cands if c <= H // 2]
            if smaller:
                th = smaller[-1]
    return tb, th


def _choose_tiles_streaming(S, H, itemsize, target_block_bytes):
    """Pick (TS, TH) for the long-S two-pass path. TS must be a mult-of-8 divisor."""
    target_elems = max(1, target_block_bytes // itemsize)
    cands = _lane_tile_candidates(H)
    th = cands[0]
    for cand in cands:
        if 8 * cand <= target_elems:
            th = cand
    ts = None
    limit = max(8, target_elems // th)
    for d in range(8, min(S, limit) + 1, 8):
        if S % d == 0:
            ts = d
    return ts, th  # ts may be None -> streaming tiling not possible


# ---------------------------------------------------------------------------
# Kernels
# ---------------------------------------------------------------------------

def _ln_resident_kernel(eps, inv_s, x_ref, w_ref, b_ref, o_ref):
    # x_ref: (TB, S, TH); w_ref/b_ref: (1, TH); o_ref: (TB, S, TH)
    x = x_ref[...].astype(jnp.float32)
    w = w_ref[...].astype(jnp.float32)
    b = b_ref[...].astype(jnp.float32)
    mean = jnp.sum(x, axis=-2, keepdims=True) * inv_s          # (TB, 1, TH)
    d = x - mean
    var = jnp.sum(d * d, axis=-2, keepdims=True) * inv_s       # centered (torch parity)
    inv = lax.rsqrt(var + eps) * w                              # rsqrt -> EUP
    o_ref[...] = (d * inv + b).astype(o_ref.dtype)


def _ln_stats_kernel(eps, inv_s, x_ref, w_ref, b_ref, scale_ref, shift_ref,
                     sum_acc, sq_acc):
    # Streaming moments over the 'arbitrary' S grid axis (carried accumulators).
    @pl.when(pl.program_id(2) == 0)
    def _():
        sum_acc[...] = jnp.zeros_like(sum_acc)
        sq_acc[...] = jnp.zeros_like(sq_acc)

    x = x_ref[...].astype(jnp.float32)
    sum_acc[...] += jnp.sum(x, axis=-2, keepdims=True)
    sq_acc[...] += jnp.sum(x * x, axis=-2, keepdims=True)

    @pl.when(pl.program_id(2) == pl.num_programs(2) - 1)
    def _():
        # TODO(synk): streaming path uses E[x^2]-E[x]^2 with f32 accumulators;
        # switch to a Welford-style combine if strongly non-centered data needs
        # tighter precision.
        w = w_ref[...].astype(jnp.float32)
        b = b_ref[...].astype(jnp.float32)
        mean = sum_acc[...] * inv_s
        var = jnp.maximum(sq_acc[...] * inv_s - mean * mean, 0.0)
        inv = lax.rsqrt(var + eps) * w
        scale_ref[...] = inv
        shift_ref[...] = b - mean * inv


def _ln_apply_kernel(x_ref, scale_ref, shift_ref, o_ref):
    x = x_ref[...].astype(jnp.float32)
    o_ref[...] = (x * scale_ref[...] + shift_ref[...]).astype(o_ref.dtype)


# ---------------------------------------------------------------------------
# pallas_call wrappers
# ---------------------------------------------------------------------------

def _layer_norm_resident(x, w2, b2, eps, tb, th, cap):
    B, S, H = x.shape
    grid = (H // th, B // tb)  # batch block varies fastest -> w/b DMAs reused
    block_bytes = tb * S * th * jnp.dtype(x.dtype).itemsize
    kernel = functools.partial(_ln_resident_kernel, float(eps), 1.0 / float(S))
    return pl.pallas_call(
        kernel,
        out_shape=jax.ShapeDtypeStruct((B, S, H), x.dtype),
        grid_spec=pltpu.PrefetchScalarGridSpec(
            num_scalar_prefetch=0,
            grid=grid,
            in_specs=[
                pl.BlockSpec((tb, S, th), lambda h, b: (b, 0, h)),
                pl.BlockSpec((1, th), lambda h, b: (0, h)),
                pl.BlockSpec((1, th), lambda h, b: (0, h)),
            ],
            out_specs=pl.BlockSpec((tb, S, th), lambda h, b: (b, 0, h)),
        ),
        compiler_params=_compiler_params(block_bytes, cap,
                                         ("parallel", "parallel")),
    )(x, w2, b2)


def _layer_norm_streaming(x, w2, b2, eps, ts, th, cap):
    B, S, H = x.shape
    tb = 1
    grid = (H // th, B // tb, S // ts)
    block_bytes = tb * ts * th * jnp.dtype(x.dtype).itemsize

    stats = functools.partial(_ln_stats_kernel, float(eps), 1.0 / float(S))
    scale, shift = pl.pallas_call(
        stats,
        out_shape=(jax.ShapeDtypeStruct((B, 1, H), jnp.float32),
                   jax.ShapeDtypeStruct((B, 1, H), jnp.float32)),
        grid_spec=pltpu.PrefetchScalarGridSpec(
            num_scalar_prefetch=0,
            grid=grid,
            in_specs=[
                pl.BlockSpec((tb, ts, th), lambda h, b, s: (b, s, h)),
                pl.BlockSpec((1, th), lambda h, b, s: (0, h)),
                pl.BlockSpec((1, th), lambda h, b, s: (0, h)),
            ],
            out_specs=[
                pl.BlockSpec((tb, 1, th), lambda h, b, s: (b, 0, h)),
                pl.BlockSpec((tb, 1, th), lambda h, b, s: (b, 0, h)),
            ],
            scratch_shapes=[pltpu.VMEM((tb, 1, th), jnp.float32),
                            pltpu.VMEM((tb, 1, th), jnp.float32)],
        ),
        compiler_params=_compiler_params(
            block_bytes, cap, ("parallel", "parallel", "arbitrary")),
    )(x, w2, b2)

    return pl.pallas_call(
        _ln_apply_kernel,
        out_shape=jax.ShapeDtypeStruct((B, S, H), x.dtype),
        grid_spec=pltpu.PrefetchScalarGridSpec(
            num_scalar_prefetch=0,
            grid=grid,
            in_specs=[
                pl.BlockSpec((tb, ts, th), lambda h, b, s: (b, s, h)),
                pl.BlockSpec((tb, 1, th), lambda h, b, s: (b, 0, h)),
                pl.BlockSpec((tb, 1, th), lambda h, b, s: (b, 0, h)),
            ],
            out_specs=pl.BlockSpec((tb, ts, th), lambda h, b, s: (b, s, h)),
        ),
        compiler_params=_compiler_params(
            block_bytes, cap, ("parallel", "parallel", "parallel")),
    )(x, scale, shift)


def _layer_norm_3d(x, weight, bias, eps, max_block_bytes=None):
    B, S, H = x.shape
    itemsize = jnp.dtype(x.dtype).itemsize
    cap = _vmem_capacity_bytes()
    vmem_budget = (cap * 3) // 5             # headroom for compiler scratch
    target_block_bytes = vmem_budget // 4    # 2 in + 2 out double-buffered blocks
    if max_block_bytes is not None:
        target_block_bytes = min(target_block_bytes, int(max_block_bytes))

    w2 = weight.reshape(1, H)
    b2 = bias.reshape(1, H)

    min_th = 128 if H % 128 == 0 else H
    if S * min_th * itemsize <= target_block_bytes:
        tb, th = _choose_tiles_resident(B, S, H, itemsize, target_block_bytes)
        return _layer_norm_resident(x, w2, b2, eps, tb, th, cap)

    ts, th = _choose_tiles_streaming(S, H, itemsize, target_block_bytes)
    if ts is not None:
        return _layer_norm_streaming(x, w2, b2, eps, ts, th, cap)

    # TODO(synk): S has no multiple-of-8 divisor small enough to stream-tile;
    # fall back to one resident block per (b, h-tile) and let the compiler fit it.
    return _layer_norm_resident(x, w2, b2, eps, 1, min_th, cap)


def layer_norm(x, weight, bias, eps=1e-12, max_block_bytes=None):
    """x: (..., S, H); weight, bias: (H,). Normalize over S, scale/shift over H."""
    if x.ndim < 2:
        raise ValueError("layer_norm expects at least 2 dims (S, H)")
    orig_shape = x.shape
    x3 = x if x.ndim == 3 else x.reshape((-1,) + x.shape[-2:])
    y = _layer_norm_3d(x3, weight, bias, eps, max_block_bytes)
    return y.reshape(orig_shape)


# ---------------------------------------------------------------------------
# Reference + self-test
# ---------------------------------------------------------------------------

def _reference(x, weight, bias, eps):
    u = jnp.mean(x, axis=-2, keepdims=True)
    s = jnp.mean((x - u) ** 2, axis=-2, keepdims=True)
    return weight * ((x - u) / jnp.sqrt(s + eps)) + bias


if __name__ == "__main__":
    key = jax.random.PRNGKey(0)
    k1, k2, k3, kw, kb = jax.random.split(key, 5)
    eps = 1e-12

    # Case 1: module-sized demo (narrow H -> full-extent lane block, no transpose).
    B, S, H = 2, 8, 32
    x = jax.random.normal(k1, (B, S, H), dtype=jnp.float32) + 0.5
    w = 1.0 + 0.1 * jax.random.normal(kw, (H,), dtype=jnp.float32)
    b = 0.1 * jax.random.normal(kb, (H,), dtype=jnp.float32)
    out = jax.block_until_ready(layer_norm(x, w, b, eps))
    ref = _reference(x, w, b, eps)
    assert out.shape == ref.shape
    assert jnp.allclose(out, ref, atol=1e-5, rtol=1e-5), "mismatch (narrow H)"

    # Case 2: lane-dense resident path (H multiple of 128, batch packing).
    B2, S2, H2 = 4, 16, 256
    x2 = jax.random.normal(k2, (B2, S2, H2), dtype=jnp.float32)
    w2 = jnp.ones((H2,), dtype=jnp.float32)
    b2 = jnp.zeros((H2,), dtype=jnp.float32)
    out2 = jax.block_until_ready(layer_norm(x2, w2, b2, eps))
    ref2 = _reference(x2, w2, b2, eps)
    assert jnp.allclose(out2, ref2, atol=1e-5, rtol=1e-5), "mismatch (wide H)"

    # Case 3: long-S streaming fallback, forced via a tiny block budget.
    B3, S3, H3 = 2, 64, 256
    x3 = jax.random.normal(k3, (B3, S3, H3), dtype=jnp.float32)
    w3 = 1.0 + 0.1 * jax.random.normal(kw, (H3,), dtype=jnp.float32)
    b3 = 0.1 * jax.random.normal(kb, (H3,), dtype=jnp.float32)
    out3 = jax.block_until_ready(
        layer_norm(x3, w3, b3, eps, max_block_bytes=4096))
    ref3 = _reference(x3, w3, b3, eps)
    assert jnp.allclose(out3, ref3, atol=2e-5, rtol=2e-5), "mismatch (streaming)"

    print("KERNEL_OK")
</pallas_src>

<mosaic_0001>
module attributes {stable_mosaic.version = 11 : i64} {
  func.func @_ln_resident_kernel(%arg0: i32, %arg1: i32, %arg2: memref<1x8x32xf32, #tpu.memory_space<vmem>>, %arg3: memref<1x32xf32, #tpu.memory_space<vmem>>, %arg4: memref<1x32xf32, #tpu.memory_space<vmem>>, %arg5: memref<1x8x32xf32, #tpu.memory_space<vmem>>) attributes {dimension_semantics = [#tpu.dimension_semantics<parallel>, #tpu.dimension_semantics<parallel>], iteration_bounds = array<i64: 1, 2>, scalar_prefetch = 0 : i64, scratch_operands = 0 : i64, tpu.core_type = #tpu.core_type<tc>, window_params = [{transform_indices = @transform_0, window_bounds = array<i64: 1, 8, 32>}, {transform_indices = @transform_1, window_bounds = array<i64: 1, 32>}, {transform_indices = @transform_2, window_bounds = array<i64: 1, 32>}, {transform_indices = @transform_3, window_bounds = array<i64: 1, 8, 32>}]} {
    %c0 = arith.constant 0 : index
    %c0_0 = arith.constant 0 : index
    %c0_1 = arith.constant 0 : index
    %0 = vector.load %arg2[%c0, %c0_0, %c0_1] : memref<1x8x32xf32, #tpu.memory_space<vmem>>, vector<1x8x32xf32>
    %c0_2 = arith.constant 0 : index
    %c0_3 = arith.constant 0 : index
    %1 = vector.load %arg3[%c0_2, %c0_3] : memref<1x32xf32, #tpu.memory_space<vmem>>, vector<1x32xf32>
    %c0_4 = arith.constant 0 : index
    %c0_5 = arith.constant 0 : index
    %2 = vector.load %arg4[%c0_4, %c0_5] : memref<1x32xf32, #tpu.memory_space<vmem>>, vector<1x32xf32>
    %cst = arith.constant dense<0.000000e+00> : vector<1x32xf32>
    %3 = vector.multi_reduction <add>, %0, %cst [1] : vector<1x8x32xf32> to vector<1x32xf32>
    %4 = vector.shape_cast %3 : vector<1x32xf32> to vector<1x1x32xf32>
    %cst_6 = arith.constant 1.250000e-01 : f32
    %5 = vector.broadcast %cst_6 : f32 to vector<1x1x32xf32>
    %6 = arith.mulf %4, %5 : vector<1x1x32xf32>
    %7 = vector.broadcast %6 : vector<1x1x32xf32> to vector<1x8x32xf32>
    %8 = arith.subf %0, %7 : vector<1x8x32xf32>
    %9 = arith.mulf %8, %8 : vector<1x8x32xf32>
    %cst_7 = arith.constant dense<0.000000e+00> : vector<1x32xf32>
    %10 = vector.multi_reduction <add>, %9, %cst_7 [1] : vector<1x8x32xf32> to vector<1x32xf32>
    %11 = vector.shape_cast %10 : vector<1x32xf32> to vector<1x1x32xf32>
    %cst_8 = arith.constant 1.250000e-01 : f32
    %12 = vector.broadcast %cst_8 : f32 to vector<1x1x32xf32>
    %13 = arith.mulf %11, %12 : vector<1x1x32xf32>
    %cst_9 = arith.constant 9.99999996E-13 : f32
    %14 = vector.broadcast %cst_9 : f32 to vector<1x1x32xf32>
    %15 = arith.addf %13, %14 : vector<1x1x32xf32>
    %16 = math.rsqrt %15 : vector<1x1x32xf32>
    %17 = vector.shape_cast %1 : vector<1x32xf32> to vector<1x1x32xf32>
    %18 = arith.mulf %16, %17 : vector<1x1x32xf32>
    %19 = vector.broadcast %18 : vector<1x1x32xf32> to vector<1x8x32xf32>
    %20 = arith.mulf %8, %19 : vector<1x8x32xf32>
    %21 = vector.shape_cast %2 : vector<1x32xf32> to vector<1x1x32xf32>
    %22 = vector.broadcast %21 : vector<1x1x32xf32> to vector<1x8x32xf32>
    %23 = arith.addf %20, %22 : vector<1x8x32xf32>
    %c0_10 = arith.constant 0 : index
    %c0_11 = arith.constant 0 : index
    %c0_12 = arith.constant 0 : index
    %24 = vector.load %arg5[%c0_10, %c0_11, %c0_12] : memref<1x8x32xf32, #tpu.memory_space<vmem>>, vector<1x8x32xf32>
    tpu.vector_store %arg5[%c0_10, %c0_11, %c0_12], %23 {strides = array<i32>} : memref<1x8x32xf32, #tpu.memory_space<vmem>>, vector<1x8x32xf32>,
    return
  }
  func.func @transform_0(%arg0: i32, %arg1: i32) -> (i32, i32, i32) {
    %c0_i32 = arith.constant 0 : i32
    %c0_i32_0 = arith.constant 0 : i32
    return %arg1, %c0_i32, %arg0 : i32, i32, i32
  }
  func.func @transform_1(%arg0: i32, %arg1: i32) -> (i32, i32) {
    %c0_i32 = arith.constant 0 : i32
    %c0_i32_0 = arith.constant 0 : i32
    return %c0_i32, %arg0 : i32, i32
  }
  func.func @transform_2(%arg0: i32, %arg1: i32) -> (i32, i32) {
    %c0_i32 = arith.constant 0 : i32
    %c0_i32_0 = arith.constant 0 : i32
    return %c0_i32, %arg0 : i32, i32
  }
  func.func @transform_3(%arg0: i32, %arg1: i32) -> (i32, i32, i32) {
    %c0_i32 = arith.constant 0 : i32
    %c0_i32_0 = arith.constant 0 : i32
    return %arg1, %c0_i32, %arg0 : i32, i32, i32
  }
}

</mosaic_0001>

<llo_original>
// kernel: tpu_custom_call.1
$region0: #{tpu_custom_call.1}
  #allocation0 [shape = 'u32[]', space=smem, size = 0x4, offset = 0x4, fixed_abs, tag = 'smem constant byte address 0x4 - core index']
  #allocation1 [shape = 'u32[144,128]{1,0:T(1,128)}', space=vmem, size = 0x12000, scoped, tag = 'internal scratch']
  %s0 = inlined_call_operand.hbm [shape: f32[2,8,32], index: 0, kind: input, shape index: {}]
  %s1 = inlined_call_operand.vmem [shape: f32[1,32], index: 1, kind: input, shape index: {}]
  %s2 = inlined_call_operand.vmem [shape: f32[1,32], index: 2, kind: input, shape index: {}]
  %s3 = inlined_call_operand.hbm [shape: f32[2,8,32], index: 3, kind: output, shape index: {}]
  %s4 = sld [smem:[#allocation0]]
  $region49: #{tpu_custom_call.1} parent=0
    _
  %s6 = ssub.s32 1, %s4
  %s7 = scalar_select 0, %s6, %s4
  $region1: #{tpu_custom_call.1} parent=0
    #allocation2 [shape = 'u8[8192]{0}', space=vmem, size = 0x2000, scoped, tag = 'input window, operand 0']
    #allocation3 [shape = 's32[2]{0}', space=sflag, size = 0x8, scoped, tag = 'scoped memory for tpu_custom_call.1']
    #allocation4 [shape = 's32[2]{0}', space=sflag, size = 0x8, scoped, tag = 'scoped memory for tpu_custom_call.1']
    #allocation5 [shape = 'u8[8192]{0}', space=vmem, size = 0x2000, scoped, tag = 'output window, operand 0']
    %8 = vsyncpa [#allocation3], 0
    %s9 = scalar_lea.sflag [#allocation3], 1
    %10 = vsyncpa %s9, 0
    %11 = vsyncpa [#allocation4], 0
    %s12 = scalar_lea.sflag [#allocation4], 1
    %13 = vsyncpa %s12, 0
    loop: start=0, step=1, limit=4
    $region2: #{tpu_custom_call.1} parent=1 // loop_pre_header
      _
    $region3: #{tpu_custom_call.1} parent=1 // loop_header
      %s15 = sphi 0, %s19
      %p16 = scmp.ge.s32.totalorder %s15, 4
      %s22 = sphi 0, %s34
      %s23 = sphi 0, %s30
      %s24 = sphi 0, %s22
      %s25 = sphi 0, %s23
      %s26 = sphi 0, %s24
      %s27 = sphi 0, %s25
      %s39 = sphi 0, %s41
      %s42 = sphi 0, %s39
      %s43 = sphi 0, %s42
      %s59 = sphi 0, %s43
      %s65 = sphi 0, %s67
      %s68 = sphi 0, %s65
      %s69 = sphi 0, %s68
      %s85 = sphi 0, %s69
      %s91 = sphi 0, %s93
      %s94 = sphi 0, %s91
      %s95 = sphi 0, %s94
      %s111 = sphi 0, %s95
      %s119 = sphi 0, %s121
      %s122 = sphi 0, %s119
      %s123 = sphi 0, %s122
      %s139 = sphi 0, %s123
    $region4: #{tpu_custom_call.1} parent=1 // loop_header_branch
      %18 = sbr.rel (%p16) target = $region8
    $region5: #{tpu_custom_call.1} parent=1 // loop_body
      %s20 = ssub.s32 %s15, 1
      %s21 = ssub.s32 %s15, 2
      %s28 = sadd.s32 1, %s23
      %p29 = scmp.ge.s32.totalorder %s28, 2
      %s30 = scalar_select %p29, 0, %s28
      %s31 = sadd.s32 1, %s22
      %s32 = scalar_select %p29, %s31, %s22
      %p33 = scmp.ge.s32.totalorder %s32, 1
      %s34 = scalar_select %p33, 0, %s32
      %s35 = ssub.s32 %s23, %s30
      %s36 = ssub.s32 %s22, %s34
      %s37 = sor.u32 %s35, %s36
      %p38 = scmp.eq.s32.totalorder %s37, 0
      %s40 = sadd.s32 %s39, 1
      %s41 = scalar_select %p38, %s39, %s40
      %p44 = pneg %p38
      %p45 = scmp.eq.s32.totalorder %s15, 1
      %p46 = por %p44, %p45
      %p47 = scmp.ne.s32.totalorder %s39, %s42
      %p48 = scmp.eq.s32.totalorder %s15, 0
      %p49 = por %p47, %p48
      %p50 = scmp.ne.s32.totalorder %s39, %s42
      %p51 = scmp.eq.s32.totalorder %s20, 1
      %p52 = por %p50, %p51
      %p53 = scmp.ne.s32.totalorder %s42, %s43
      %p54 = scmp.eq.s32.totalorder %s20, 0
      %p55 = por %p53, %p54
      %p56 = scmp.ne.s32.totalorder %s42, %s43
      %p57 = scmp.eq.s32.totalorder %s21, 1
      %p58 = por %p56, %p57
      %p60 = scmp.ne.s32.totalorder %s43, %s59
      %p61 = scmp.eq.s32.totalorder %s21, 0
      %p62 = por %p60, %p61
      %s63 = ssub.s32 %s22, %s34
      %p64 = scmp.eq.s32.totalorder %s63, 0
      %s66 = sadd.s32 %s65, 1
      %s67 = scalar_select %p64, %s65, %s66
      %p70 = pneg %p64
      %p71 = scmp.eq.s32.totalorder %s15, 1
      %p72 = por %p70, %p71
      %p73 = scmp.ne.s32.totalorder %s65, %s68
      %p74 = scmp.eq.s32.totalorder %s15, 0
      %p75 = por %p73, %p74
      %p76 = scmp.ne.s32.totalorder %s65, %s68
      %p77 = scmp.eq.s32.totalorder %s20, 1
      %p78 = por %p76, %p77
      %p79 = scmp.ne.s32.totalorder %s68, %s69
      %p80 = scmp.eq.s32.totalorder %s20, 0
      %p81 = por %p79, %p80
      %p82 = scmp.ne.s32.totalorder %s68, %s69
      %p83 = scmp.eq.s32.totalorder %s21, 1
      %p84 = por %p82, %p83
      %p86 = scmp.ne.s32.totalorder %s69, %s85
      %p87 = scmp.eq.s32.totalorder %s21, 0
      %p88 = por %p86, %p87
      %s89 = ssub.s32 %s22, %s34
      %p90 = scmp.eq.s32.totalorder %s89, 0
      %s92 = sadd.s32 %s91, 1
      %s93 = scalar_select %p90, %s91, %s92
      %p96 = pneg %p90
      %p97 = scmp.eq.s32.totalorder %s15, 1
      %p98 = por %p96, %p97
      %p99 = scmp.ne.s32.totalorder %s91, %s94
      %p100 = scmp.eq.s32.totalorder %s15, 0
      %p101 = por %p99, %p100
      %p102 = scmp.ne.s32.totalorder %s91, %s94
      %p103 = scmp.eq.s32.totalorder %s20, 1
      %p104 = por %p102, %p103
      %p105 = scmp.ne.s32.totalorder %s94, %s95
      %p106 = scmp.eq.s32.totalorder %s20, 0
      %p107 = por %p105, %p106
      %p108 = scmp.ne.s32.totalorder %s94, %s95
      %p109 = scmp.eq.s32.totalorder %s21, 1
      %p110 = por %p108, %p109
      %p112 = scmp.ne.s32.totalorder %s95, %s111
      %p113 = scmp.eq.s32.totalorder %s21, 0
      %p114 = por %p112, %p113
      %s115 = ssub.s32 %s23, %s30
      %s116 = ssub.s32 %s22, %s34
      %s117 = sor.u32 %s115, %s116
      %p118 = scmp.eq.s32.totalorder %s117, 0
      %s120 = sadd.s32 %s119, 1
      %s121 = scalar_select %p118, %s119, %s120
      %p124 = pneg %p118
      %p125 = scmp.eq.s32.totalorder %s15, 1
      %p126 = por %p124, %p125
      %p127 = scmp.ne.s32.totalorder %s119, %s122
      %p128 = scmp.eq.s32.totalorder %s15, 0
      %p129 = por %p127, %p128
      %p130 = scmp.ne.s32.totalorder %s119, %s122
      %p131 = scmp.eq.s32.totalorder %s20, 1
      %p132 = por %p130, %p131
      %p133 = scmp.ne.s32.totalorder %s122, %s123
      %p134 = scmp.eq.s32.totalorder %s20, 0
      %p135 = por %p133, %p134
      %p136 = scmp.ne.s32.totalorder %s122, %s123
      %p137 = scmp.eq.s32.totalorder %s21, 1
      %p138 = por %p136, %p137
      %p140 = scmp.ne.s32.totalorder %s123, %s139
      %p141 = scmp.eq.s32.totalorder %s21, 0
      %p142 = por %p140, %p141
      %p143 = scmp.le.s32.totalorder 1, %s15
      %p144 = scmp.lt.s32.totalorder %s15, 3
      %p145 = pnand %p143, %p144
      %p146 = pneg %p145
      // Predicated region
      $region9: #{tpu_custom_call.1} parent=5 // pred_check
        _
      $region10: #{tpu_custom_call.1} parent=5 // pred_check_branch
        %148 = sbr.rel (%p145) target = $region12
      $region11: #{tpu_custom_call.1} parent=5 // pred_region
        %s149 = ssub.s32 %s15, 1
        // Predicated region
        $region13: #{tpu_custom_call.1} parent=11 // pred_check
          %p150 = pneg %p81
        $region14: #{tpu_custom_call.1} parent=11 // pred_check_branch
          %152 = sbr.rel (%p150) target = $region16
        $region15: #{tpu_custom_call.1} parent=11 // pred_region
          %p153 = scmp.lt.s32.totalorder %s24, 0
          %s154 = scalar_select %p153, %s24, 0
          %s155 = scalar_lea.vmem %s1, %s154
        $region16: #{tpu_custom_call.1} parent=11 // pred_fallthru
          _
        // Predicated region
        $region17: #{tpu_custom_call.1} parent=11 // pred_check
          %p156 = pneg %p107
        $region18: #{tpu_custom_call.1} parent=11 // pred_check_branch
          %158 = sbr.rel (%p156) target = $region20
        $region19: #{tpu_custom_call.1} parent=11 // pred_region
          %p159 = scmp.lt.s32.totalorder %s24, 0
          %s160 = scalar_select %p159, %s24, 0
          %s161 = scalar_lea.vmem %s2, %s160
        $region20: #{tpu_custom_call.1} parent=11 // pred_fallthru
          _
      $region12: #{tpu_custom_call.1} parent=5 // pred_fallthru
        _
      %p162 = scmp.lt.s32.totalorder %s15, 2
      // Predicated region
      $region21: #{tpu_custom_call.1} parent=5 // pred_check
        %p163 = pneg %p162
      $region22: #{tpu_custom_call.1} parent=5 // pred_check_branch
        %165 = sbr.rel (%p163) target = $region24
      $region23: #{tpu_custom_call.1} parent=5 // pred_region
        // Predicated region
        $region25: #{tpu_custom_call.1} parent=23 // pred_check
          %p166 = pneg %p49
        $region26: #{tpu_custom_call.1} parent=23 // pred_check_branch
          %168 = sbr.rel (%p166) target = $region28
        $region27: #{tpu_custom_call.1} parent=23 // pred_region
          %s169 = sand.u32 %s39, 1
          %s170 = scalar_lea.sflag [#allocation3], %s169
          %s171 = sand.u32 %s39, 1
          %s172 = smul.addr %s171, 8
          %s173 = scalar_lea.vmem [#allocation2], %s172
          %s175 = ssub.s32 128, 128
          %176 = vsyncadd %s170, %s175
          %s177 = sadd.s32 %s22, %s23
          %s178 = smul.addr %s177, 128
          %s179 = scalar_lea.hbm %s0, %s178
          %s181 = sshll.u32 %s173, 4
          %s182 = int_to_ptr.vmem [resolvable:$true] %s181
          %184 = dma.hbm_to_vmem [thread:$0]  %s179, 128, %s182, %s170
        $region28: #{tpu_custom_call.1} parent=23 // pred_fallthru
          _
      $region24: #{tpu_custom_call.1} parent=5 // pred_fallthru
        _
      %p185 = scmp.le.s32.totalorder 1, %s15
      %p186 = scmp.lt.s32.totalorder %s15, 3
      %p187 = pnand %p185, %p186
      %p188 = pneg %p187
      // Predicated region
      $region29: #{tpu_custom_call.1} parent=5 // pred_check
        _
      $region30: #{tpu_custom_call.1} parent=5 // pred_check_branch
        %190 = sbr.rel (%p187) target = $region32
      $region31: #{tpu_custom_call.1} parent=5 // pred_region
        %s191 = ssub.s32 %s15, 1
        %s192 = sand.u32 %s42, 1
        %s193 = scalar_lea.sflag [#allocation3], %s192
        %s194 = sand.u32 %s42, 1
        %s195 = smul.addr %s194, 8
        %s196 = scalar_lea.vmem [#allocation2], %s195
        // Predicated region
        $region33: #{tpu_custom_call.1} parent=31 // pred_check
          %p197 = pneg %p55
        $region34: #{tpu_custom_call.1} parent=31 // pred_check_branch
          %199 = sbr.rel (%p197) target = $region36
        $region35: #{tpu_custom_call.1} parent=31 // pred_region
          %200 = dma.done %s193, 128
        $region36: #{tpu_custom_call.1} parent=31 // pred_fallthru
          _
        %s201 = sand.u32 %s42, 1
        %s202 = scalar_lea.sflag [#allocation3], %s201
        %s203 = sand.u32 %s42, 1
        %s204 = smul.addr %s203, 8
        %s205 = scalar_lea.vmem [#allocation2], %s204
        %p206 = pneg %p55
        %p207 = pneg %p52
        %p208 = scmp.lt.s32.totalorder %s24, 0
        %s209 = scalar_select %p208, %s24, 0
        %s210 = scalar_lea.vmem %s1, %s209
        %p211 = pneg %p81
        %p212 = pneg %p78
        %p213 = scmp.lt.s32.totalorder %s24, 0
        %s214 = scalar_select %p213, %s24, 0
        %s215 = scalar_lea.vmem %s2, %s214
        %p216 = pneg %p107
        %p217 = pneg %p104
        %p218 = pneg %p135
        %p219 = pneg %p132
        %s220 = sand.u32 %s122, 1
        %s221 = scalar_lea.sflag [#allocation4], %s220
        %s222 = sand.u32 %s122, 1
        %s223 = smul.addr %s222, 8
        %s224 = scalar_lea.vmem [#allocation5], %s223
        %p225 = scmp.lt.s32.totalorder %s24, 0
        %s226 = scalar_select %p225, %s24, 0
        %s227 = scalar_lea.vmem %s1, %s226
        %p228 = scmp.lt.s32.totalorder %s24, 0
        %s229 = scalar_select %p228, %s24, 0
        %s230 = scalar_lea.vmem %s2, %s229
        %v231 = vld [vmem:[%s196] sm:$0xff]
        %v232 = vld [vmem:[%s227] sm:$0x1]
        %v233 = vld [vmem:[%s230] sm:$0x1]
        %vm234 = vcmask 261120
        %v235 = vsel %vm234, %v231, 0.0
        %v236 = vrot.slane %v235, 4
        %v237 = vadd.f32 %v235, %v236
        %v238 = vrot.slane %v237, 2
        %v239 = vadd.f32 %v237, %v238
        %v240 = vrot.slane %v239, 1
        %v241 = vadd.f32 %v239, %v240
        %v242 = vmul.f32 %v241, 0.125
        %v243 = vsub.f32 %v231, %v242
        %v244 = vmul.f32 %v243, %v243
        %v245 = vsel %vm234, %v244, 0.0
        %v246 = vrot.slane %v245, 4
        %v247 = vadd.f32 %v245, %v246
        %v248 = vrot.slane %v247, 2
        %v249 = vadd.f32 %v247, %v248
        %v250 = vrot.slane %v249, 1
        %v251 = vadd.f32 %v249, %v250
        %v252 = vmul.f32 %v251, 0.125
        %v253 = vadd.f32 %v252, 1e-12
        %v254 = vrsqrt.pop %v253
        %v255 = vmul.f32 %v254, %v232
        %v256 = vlaneseq
        %v257 = vshrl.u32 %v256, 7
        %v258 = vsub.s32 0, %v257
        %v259 = vrot.slane %v255, %v258
        %v260 = vmul.f32 %v243, %v259
        %v262 = vlaneseq
        %v263 = vshrl.u32 %v262, 7
        %v264 = vsub.s32 0, %v263
        %v265 = vrot.slane %v233, %v264
        %v267 = vadd.f32 %v260, %v265
        %268 = vst.msk [vmem:[%s224] sm:$0xff] %vm234, %v267
        %s269 = sand.u32 %s122, 1
        %s270 = scalar_lea.sflag [#allocation4], %s269
        %s271 = sand.u32 %s122, 1
        %s272 = smul.addr %s271, 8
        %s273 = scalar_lea.vmem [#allocation5], %s272
        // Predicated region
        $region37: #{tpu_custom_call.1} parent=31 // pred_check
          %p274 = pneg %p132
        $region38: #{tpu_custom_call.1} parent=31 // pred_check_branch
          %276 = sbr.rel (%p274) target = $region40
        $region39: #{tpu_custom_call.1} parent=31 // pred_region
          %s278 = ssub.s32 128, 128
          %279 = vsyncadd %s270, %s278
          %s280 = sadd.s32 %s24, %s25
          %s281 = smul.addr %s280, 128
          %s282 = scalar_lea.hbm %s3, %s281
          %s284 = sshll.u32 %s273, 4
          %s285 = int_to_ptr.vmem [resolvable:$true] %s284
          %287 = dma.vmem_to_hbm [thread:$0]  %s285, 128, %s282, %s270
        $region40: #{tpu_custom_call.1} parent=31 // pred_fallthru
          _
      $region32: #{tpu_custom_call.1} parent=5 // pred_fallthru
        _
      %p288 = scmp.le.s32.totalorder 2, %s15
      // Predicated region
      $region41: #{tpu_custom_call.1} parent=5 // pred_check
        %p289 = pneg %p288
      $region42: #{tpu_custom_call.1} parent=5 // pred_check_branch
        %291 = sbr.rel (%p289) target = $region44
      $region43: #{tpu_custom_call.1} parent=5 // pred_region
        %s292 = ssub.s32 %s15, 2
        // Predicated region
        $region45: #{tpu_custom_call.1} parent=43 // pred_check
          %p293 = pneg %p138
        $region46: #{tpu_custom_call.1} parent=43 // pred_check_branch
          %295 = sbr.rel (%p293) target = $region48
        $region47: #{tpu_custom_call.1} parent=43 // pred_region
          %s296 = sand.u32 %s123, 1
          %s297 = scalar_lea.sflag [#allocation4], %s296
          %s298 = sand.u32 %s123, 1
          %s299 = smul.addr %s298, 8
          %s300 = scalar_lea.vmem [#allocation5], %s299
          %301 = dma.done %s297, 128
        $region48: #{tpu_custom_call.1} parent=43 // pred_fallthru
          _
      $region44: #{tpu_custom_call.1} parent=5 // pred_fallthru
        _
    $region6: #{tpu_custom_call.1} parent=1 // loop_footer
      %s19 = sadd.s32 1, %s15
    $region7: #{tpu_custom_call.1} parent=1 // loop_footer_branch
      %14 = sbr.rel target = $region3
    $region8: #{tpu_custom_call.1} parent=1 // loop_exit
      _
    %302 = vsyncpa [#allocation3], 1
    %s303 = scalar_lea.sflag [#allocation3], 1
    %304 = vsyncpa %s303, 1
    %305 = vsyncpa [#allocation4], 1
    %s306 = scalar_lea.sflag [#allocation4], 1
    %307 = vsyncpa %s306, 1

</llo_original>
